<compile_context>
chip_gen: v7x
topology: tpu7x:2x2x1
jax: 0.10.0
libtpu: 0.0.40
codegen_flags: <defaults>
</compile_context>

<pallas_src>
import functools

import jax
import jax.numpy as jnp
from jax import lax
from jax.experimental import pallas as pl
from jax.experimental.pallas import tpu as pltpu


def _round_up(x, m):
    return (x + m - 1) // m * m


def dan_encoder_kernel(idx_ref, feat_ref, tw1_ref, w1s_ref, b1_ref, w2_ref, b2_ref,
                       loc_ref, scale_ref, *, seq_len, vocab_pad, tp, mxu_dtype):
    idx_blk = idx_ref[...]                                        # (Bt, L) int32
    bt = idx_blk.shape[0]

    # ---- token-count histogram over the sequence (small vocab -> pure VPU work) ----
    # counts[b, v] = #{l : idx[b, l] == v}.  Padding token (v=0) maps to a zero row of
    # TW1, so it contributes nothing to the embedding matmul.
    lane_v = lax.broadcasted_iota(jnp.int32, (bt, vocab_pad), 1)
    counts = jnp.zeros((bt, vocab_pad), jnp.float32)
    for l in range(seq_len):                                      # compile-time unrolled (L small)
        counts = counts + (lane_v == idx_blk[:, l:l + 1]).astype(jnp.float32)

    # ---- read depth (calc_readdepth=True): number of non-padding tokens ----
    rd = jnp.float32(seq_len) - counts[:, 0:1]                    # (Bt, 1)
    rd = jnp.maximum(rd, 1.0)      # guards padded batch rows; reference would NaN at rd==0
    inv_rd = 1.0 / rd                                             # exact per-row scalar
    log_rd = jnp.log(rd)

    # ---- small-feature block: lane 0 carries log(read_depth), rest covariates/extra ----
    feat = feat_ref[...]                                          # (Bt, Kp) f32
    lane_k = lax.broadcasted_iota(jnp.int32, feat.shape, 1)
    feat = jnp.where(lane_k == 0, log_rd, feat)

    # ---- FC1 (BatchNorm folded).  Embedding + W1[:E] pre-fused into TW1 = table @ W1e,
    #      so  (counts @ TW1) * (1/rd) == ((counts @ table) / rd) @ W1e  exactly
    #      (per-row scalar commutes). ----
    h = jnp.dot(counts.astype(mxu_dtype), tw1_ref[...],
                preferred_element_type=jnp.float32) * inv_rd
    h = h + jnp.dot(feat.astype(mxu_dtype), w1s_ref[...],
                    preferred_element_type=jnp.float32)
    h = jnp.maximum(h + b1_ref[...], 0.0)

    # ---- FC2 (BatchNorm folded), loc/scale halves packed into one 2*Tp-wide matmul ----
    out = jnp.dot(h.astype(mxu_dtype), w2_ref[...],
                  preferred_element_type=jnp.float32) + b2_ref[...]
    loc_ref[...] = out[:, :tp]                                    # slice at 128-lane tile boundary
    scale_ref[...] = jax.nn.softplus(out[:, tp:])


def fold_batchnorm(W, b, gamma, beta, mean, var, eps):
    """Fold eval-mode BatchNorm1d into the preceding Linear (exact)."""
    s = gamma / jnp.sqrt(var + eps)
    Wf = W * s[None, :]
    bf = (b * s + (beta - mean * s))[None, :]
    return Wf, bf


def prepare_params(table, W1, b1, bn1, W2, b2, bn2, *, embedding_size, num_topics,
                   eps=1e-5, mxu_dtype=jnp.bfloat16):
    E, T = embedding_size, num_topics
    W1f, b1f = fold_batchnorm(W1, b1, *bn1, eps)
    W2f, b2f = fold_batchnorm(W2, b2, *bn2, eps)

    H = W1f.shape[1]
    Hp = _round_up(H, 128)                     # lane-dense hidden
    Tp = _round_up(T, 128)                     # lane-dense outputs
    V1 = table.shape[0]                        # vocab rows incl. padding row 0
    Vp = _round_up(V1, 128)                    # lane-dense counts / contracting dim
    n_small = W1f.shape[0] - E                 # 1 (log rd) + num_covariates + num_extra
    Kp = _round_up(max(n_small, 1), 8)         # small feature stream (sublane-aligned)

    # Embedding + FC1(embedding part) fusion: TW1[v] = table[v] @ W1[:E]  (row 0 stays zero).
    tw1 = jnp.zeros((Vp, Hp), jnp.float32)
    tw1 = tw1.at[:V1, :H].set(
        jnp.dot(table.astype(jnp.float32), W1f[:E], precision=lax.Precision.HIGHEST))

    w1s = jnp.zeros((Kp, Hp), jnp.float32).at[:n_small, :H].set(W1f[E:])
    b1p = jnp.zeros((1, Hp), jnp.float32).at[:, :H].set(b1f)

    # FC2 loc/scale halves packed side by side in one lane-dense (Hp, 2*Tp) weight.
    w2 = jnp.zeros((Hp, 2 * Tp), jnp.float32)
    w2 = w2.at[:H, :T].set(W2f[:, :T])
    w2 = w2.at[:H, Tp:Tp + T].set(W2f[:, T:2 * T])
    b2p = jnp.zeros((1, 2 * Tp), jnp.float32)
    b2p = b2p.at[:, :T].set(b2f[:, :T])
    b2p = b2p.at[:, Tp:Tp + T].set(b2f[:, T:2 * T])

    return dict(
        tw1=tw1.astype(mxu_dtype), w1s=w1s.astype(mxu_dtype), b1=b1p,
        w2=w2.astype(mxu_dtype), b2=b2p,
        n_small=n_small, kp=Kp, tp=Tp, vp=Vp, hp=Hp, mxu_dtype=mxu_dtype,
    )


def dan_encoder_forward(idx, read_depth, covariates, extra_features, params, *,
                        num_topics, block_b=256):
    # read_depth is ignored (calc_readdepth == True in the reference module).
    del read_depth
    B, L = idx.shape
    C = covariates.shape[1]
    Xf = extra_features.shape[1]
    Kp, Tp, Vp = params["kp"], params["tp"], params["vp"]
    mxu_dtype = params["mxu_dtype"]

    # block_b is sweepable; shrink it for tiny batches so we don't pad B up to 256.
    # For v7x keep the grid >= 2 steps at production batch sizes (two TensorCores).
    block_b_eff = min(block_b, _round_up(B, 8))
    Bp = _round_up(B, block_b_eff)

    idx_p = jnp.zeros((Bp, L), jnp.int32).at[:B].set(idx.astype(jnp.int32))

    # small-feature block: [ log_rd placeholder | covariates | extra | zero pad ]
    feat = jnp.zeros((Bp, Kp), jnp.float32)
    feat = feat.at[:B, 1:1 + C].set(covariates.astype(jnp.float32))
    feat = feat.at[:B, 1 + C:1 + C + Xf].set(extra_features.astype(jnp.float32))

    kernel = functools.partial(dan_encoder_kernel, seq_len=L, vocab_pad=Vp, tp=Tp,
                               mxu_dtype=mxu_dtype)

    res = lambda i: (0, 0)   # weights resident across the batch grid
    bat = lambda i: (i, 0)   # batch-tiled operands / outputs

    loc_pad, scale_pad = pl.pallas_call(
        kernel,
        out_shape=(jax.ShapeDtypeStruct((Bp, Tp), jnp.float32),
                   jax.ShapeDtypeStruct((Bp, Tp), jnp.float32)),
        grid_spec=pltpu.PrefetchScalarGridSpec(
            num_scalar_prefetch=0,
            grid=(Bp // block_b_eff,),
            in_specs=[
                pl.BlockSpec((block_b_eff, L), bat),        # idx (streamed once)
                pl.BlockSpec((block_b_eff, Kp), bat),       # small-feature block
                pl.BlockSpec(params["tw1"].shape, res),     # table @ W1e (resident)
                pl.BlockSpec(params["w1s"].shape, res),
                pl.BlockSpec(params["b1"].shape, res),
                pl.BlockSpec(params["w2"].shape, res),
                pl.BlockSpec(params["b2"].shape, res),
            ],
            out_specs=[pl.BlockSpec((block_b_eff, Tp), bat),
                       pl.BlockSpec((block_b_eff, Tp), bat)],
        ),
        compiler_params=pltpu.CompilerParams(
            dimension_semantics=("parallel",),
            vmem_limit_bytes=32 * 1024 * 1024),
    )(idx_p, feat, params["tw1"], params["w1s"], params["b1"], params["w2"], params["b2"])

    return loc_pad[:B, :num_topics], scale_pad[:B, :num_topics]


if __name__ == "__main__":
    # Small synthetic config (num_layers = 3 -> two Linear layers).
    B, L = 16, 16
    num_endog_features = 64          # vocab rows = 65 (incl. padding idx 0)
    embedding_size = 32
    hidden = 32
    num_topics = 4
    num_covariates = 2
    num_extra_features = 3
    eps = 1e-5

    key = jax.random.PRNGKey(0)
    ks = jax.random.split(key, 16)

    idx = jax.random.randint(ks[0], (B, L), 0, num_endog_features + 1, dtype=jnp.int32)
    idx = idx.at[:, 0].set(jnp.maximum(idx[:, 0], 1))        # >=1 non-pad token per row
    covariates = jax.random.normal(ks[1], (B, num_covariates), jnp.float32)
    extra_features = jax.random.normal(ks[2], (B, num_extra_features), jnp.float32)
    read_depth_in = jnp.ones((B, 1), jnp.float32)            # ignored (calc_readdepth)

    table = jax.random.normal(ks[3], (num_endog_features + 1, embedding_size), jnp.float32)
    table = table.at[0].set(0.0)                             # padding_idx = 0

    in_dim = embedding_size + 1 + num_covariates + num_extra_features
    out_dim = 2 * num_topics
    W1 = 0.1 * jax.random.normal(ks[4], (in_dim, hidden), jnp.float32)
    b1 = 0.1 * jax.random.normal(ks[5], (hidden,), jnp.float32)
    W2 = 0.1 * jax.random.normal(ks[6], (hidden, out_dim), jnp.float32)
    b2 = 0.1 * jax.random.normal(ks[7], (out_dim,), jnp.float32)

    # BatchNorm1d (eval): random affine + non-trivial running stats
    bn1 = (1.0 + 0.1 * jax.random.normal(ks[8], (hidden,), jnp.float32),     # gamma
           0.1 * jax.random.normal(ks[9], (hidden,), jnp.float32),           # beta
           0.05 * jax.random.normal(ks[10], (hidden,), jnp.float32),         # running mean
           1.0 + 0.1 * jax.random.uniform(ks[11], (hidden,), jnp.float32))   # running var
    bn2 = (1.0 + 0.1 * jax.random.normal(ks[12], (out_dim,), jnp.float32),
           0.1 * jax.random.normal(ks[13], (out_dim,), jnp.float32),
           0.05 * jax.random.normal(ks[14], (out_dim,), jnp.float32),
           1.0 + 0.1 * jax.random.uniform(ks[15], (out_dim,), jnp.float32))

    # ---- pure-JAX reference (transcription of the PyTorch eval forward) ----
    def ref_forward():
        rd = jnp.sum((idx > 0), axis=-1, keepdims=True).astype(jnp.float32)
        ave = table[idx].sum(1) / rd
        Xc = jnp.concatenate([ave, jnp.log(rd), covariates, extra_features], axis=1)
        h = Xc @ W1 + b1
        g, be, m, v = bn1
        h = (h - m) / jnp.sqrt(v + eps) * g + be
        h = jnp.maximum(h, 0.0)
        o = h @ W2 + b2
        g2, be2, m2, v2 = bn2
        o = (o - m2) / jnp.sqrt(v2 + eps) * g2 + be2
        return o[:, :num_topics], jax.nn.softplus(o[:, num_topics:2 * num_topics])

    loc_ref, scale_ref = ref_forward()

    # ---- f32 MXU operands: exact path ----
    params32 = prepare_params(table, W1, b1, bn1, W2, b2, bn2,
                              embedding_size=embedding_size, num_topics=num_topics,
                              eps=eps, mxu_dtype=jnp.float32)
    loc, scale = dan_encoder_forward(idx, read_depth_in, covariates, extra_features,
                                     params32, num_topics=num_topics, block_b=256)
    loc, scale = jax.block_until_ready((loc, scale))
    assert jnp.allclose(loc, loc_ref, atol=1e-4, rtol=1e-4)
    assert jnp.allclose(scale, scale_ref, atol=1e-4, rtol=1e-4)

    # ---- bf16 MXU operands (default fast path on all gens), f32 accumulation ----
    params_bf16 = prepare_params(table, W1, b1, bn1, W2, b2, bn2,
                                 embedding_size=embedding_size, num_topics=num_topics,
                                 eps=eps, mxu_dtype=jnp.bfloat16)
    loc_b, scale_b = dan_encoder_forward(idx, read_depth_in, covariates, extra_features,
                                         params_bf16, num_topics=num_topics, block_b=256)
    loc_b, scale_b = jax.block_until_ready((loc_b, scale_b))
    assert jnp.allclose(loc_b, loc_ref, atol=3e-2, rtol=3e-2)
    assert jnp.allclose(scale_b, scale_ref, atol=3e-2, rtol=3e-2)

    print("KERNEL_OK")
</pallas_src>

<mosaic_0001>
module attributes {stable_mosaic.version = 11 : i64} {
  func.func @dan_encoder_kernel(%arg0: i32, %arg1: memref<16x16xi32, #tpu.memory_space<vmem>>, %arg2: memref<16x8xf32, #tpu.memory_space<vmem>>, %arg3: memref<128x128xf32, #tpu.memory_space<vmem>>, %arg4: memref<8x128xf32, #tpu.memory_space<vmem>>, %arg5: memref<1x128xf32, #tpu.memory_space<vmem>>, %arg6: memref<128x256xf32, #tpu.memory_space<vmem>>, %arg7: memref<1x256xf32, #tpu.memory_space<vmem>>, %arg8: memref<16x128xf32, #tpu.memory_space<vmem>>, %arg9: memref<16x128xf32, #tpu.memory_space<vmem>>) attributes {dimension_semantics = [#tpu.dimension_semantics<parallel>], iteration_bounds = array<i64: 1>, scalar_prefetch = 0 : i64, scratch_operands = 0 : i64, tpu.core_type = #tpu.core_type<tc>, window_params = [{transform_indices = @transform_0, window_bounds = array<i64: 16, 16>}, {transform_indices = @transform_1, window_bounds = array<i64: 16, 8>}, {pipeline_mode = #tpu.pipeline_mode<synchronous>, transform_indices = @transform_2, window_bounds = array<i64: 128, 128>}, {pipeline_mode = #tpu.pipeline_mode<synchronous>, transform_indices = @transform_3, window_bounds = array<i64: 8, 128>}, {pipeline_mode = #tpu.pipeline_mode<synchronous>, transform_indices = @transform_4, window_bounds = array<i64: 1, 128>}, {pipeline_mode = #tpu.pipeline_mode<synchronous>, transform_indices = @transform_5, window_bounds = array<i64: 128, 256>}, {pipeline_mode = #tpu.pipeline_mode<synchronous>, transform_indices = @transform_6, window_bounds = array<i64: 1, 256>}, {transform_indices = @transform_7, window_bounds = array<i64: 16, 128>}, {transform_indices = @transform_8, window_bounds = array<i64: 16, 128>}]} {
    %c0 = arith.constant 0 : index
    %c0_0 = arith.constant 0 : index
    %0 = vector.load %arg1[%c0, %c0_0] : memref<16x16xi32, #tpu.memory_space<vmem>>, vector<16x16xi32>
    %1 = tpu.iota {dimensions = array<i32: 1>} : vector<16x128xi32>
    %cst = arith.constant 0.000000e+00 : f32
    %2 = vector.broadcast %cst : f32 to vector<16x128xf32>
    %3 = vector.extract_strided_slice %0 {offsets = [0, 0], sizes = [16, 1], strides = [1, 1]} : vector<16x16xi32> to vector<16x1xi32>
    %4 = vector.broadcast %3 : vector<16x1xi32> to vector<16x128xi32>
    %5 = arith.cmpi eq, %1, %4 : vector<16x128xi32>
    %6 = arith.extui %5 : vector<16x128xi1> to vector<16x128xi32>
    %7 = arith.sitofp %6 : vector<16x128xi32> to vector<16x128xf32>
    %8 = arith.addf %2, %7 : vector<16x128xf32>
    %9 = vector.extract_strided_slice %0 {offsets = [0, 1], sizes = [16, 1], strides = [1, 1]} : vector<16x16xi32> to vector<16x1xi32>
    %10 = vector.broadcast %9 : vector<16x1xi32> to vector<16x128xi32>
    %11 = arith.cmpi eq, %1, %10 : vector<16x128xi32>
    %12 = arith.extui %11 : vector<16x128xi1> to vector<16x128xi32>
    %13 = arith.sitofp %12 : vector<16x128xi32> to vector<16x128xf32>
    %14 = arith.addf %8, %13 : vector<16x128xf32>
    %15 = vector.extract_strided_slice %0 {offsets = [0, 2], sizes = [16, 1], strides = [1, 1]} : vector<16x16xi32> to vector<16x1xi32>
    %16 = vector.broadcast %15 : vector<16x1xi32> to vector<16x128xi32>
    %17 = arith.cmpi eq, %1, %16 : vector<16x128xi32>
    %18 = arith.extui %17 : vector<16x128xi1> to vector<16x128xi32>
    %19 = arith.sitofp %18 : vector<16x128xi32> to vector<16x128xf32>
    %20 = arith.addf %14, %19 : vector<16x128xf32>
    %21 = vector.extract_strided_slice %0 {offsets = [0, 3], sizes = [16, 1], strides = [1, 1]} : vector<16x16xi32> to vector<16x1xi32>
    %22 = vector.broadcast %21 : vector<16x1xi32> to vector<16x128xi32>
    %23 = arith.cmpi eq, %1, %22 : vector<16x128xi32>
    %24 = arith.extui %23 : vector<16x128xi1> to vector<16x128xi32>
    %25 = arith.sitofp %24 : vector<16x128xi32> to vector<16x128xf32>
    %26 = arith.addf %20, %25 : vector<16x128xf32>
    %27 = vector.extract_strided_slice %0 {offsets = [0, 4], sizes = [16, 1], strides = [1, 1]} : vector<16x16xi32> to vector<16x1xi32>
    %28 = vector.broadcast %27 : vector<16x1xi32> to vector<16x128xi32>
    %29 = arith.cmpi eq, %1, %28 : vector<16x128xi32>
    %30 = arith.extui %29 : vector<16x128xi1> to vector<16x128xi32>
    %31 = arith.sitofp %30 : vector<16x128xi32> to vector<16x128xf32>
    %32 = arith.addf %26, %31 : vector<16x128xf32>
    %33 = vector.extract_strided_slice %0 {offsets = [0, 5], sizes = [16, 1], strides = [1, 1]} : vector<16x16xi32> to vector<16x1xi32>
    %34 = vector.broadcast %33 : vector<16x1xi32> to vector<16x128xi32>
    %35 = arith.cmpi eq, %1, %34 : vector<16x128xi32>
    %36 = arith.extui %35 : vector<16x128xi1> to vector<16x128xi32>
    %37 = arith.sitofp %36 : vector<16x128xi32> to vector<16x128xf32>
    %38 = arith.addf %32, %37 : vector<16x128xf32>
    %39 = vector.extract_strided_slice %0 {offsets = [0, 6], sizes = [16, 1], strides = [1, 1]} : vector<16x16xi32> to vector<16x1xi32>
    %40 = vector.broadcast %39 : vector<16x1xi32> to vector<16x128xi32>
    %41 = arith.cmpi eq, %1, %40 : vector<16x128xi32>
    %42 = arith.extui %41 : vector<16x128xi1> to vector<16x128xi32>
    %43 = arith.sitofp %42 : vector<16x128xi32> to vector<16x128xf32>
    %44 = arith.addf %38, %43 : vector<16x128xf32>
    %45 = vector.extract_strided_slice %0 {offsets = [0, 7], sizes = [16, 1], strides = [1, 1]} : vector<16x16xi32> to vector<16x1xi32>
    %46 = vector.broadcast %45 : vector<16x1xi32> to vector<16x128xi32>
    %47 = arith.cmpi eq, %1, %46 : vector<16x128xi32>
    %48 = arith.extui %47 : vector<16x128xi1> to vector<16x128xi32>
    %49 = arith.sitofp %48 : vector<16x128xi32> to vector<16x128xf32>
    %50 = arith.addf %44, %49 : vector<16x128xf32>
    %51 = vector.extract_strided_slice %0 {offsets = [0, 8], sizes = [16, 1], strides = [1, 1]} : vector<16x16xi32> to vector<16x1xi32>
    %52 = vector.broadcast %51 : vector<16x1xi32> to vector<16x128xi32>
    %53 = arith.cmpi eq, %1, %52 : vector<16x128xi32>
    %54 = arith.extui %53 : vector<16x128xi1> to vector<16x128xi32>
    %55 = arith.sitofp %54 : vector<16x128xi32> to vector<16x128xf32>
    %56 = arith.addf %50, %55 : vector<16x128xf32>
    %57 = vector.extract_strided_slice %0 {offsets = [0, 9], sizes = [16, 1], strides = [1, 1]} : vector<16x16xi32> to vector<16x1xi32>
    %58 = vector.broadcast %57 : vector<16x1xi32> to vector<16x128xi32>
    %59 = arith.cmpi eq, %1, %58 : vector<16x128xi32>
    %60 = arith.extui %59 : vector<16x128xi1> to vector<16x128xi32>
    %61 = arith.sitofp %60 : vector<16x128xi32> to vector<16x128xf32>
    %62 = arith.addf %56, %61 : vector<16x128xf32>
    %63 = vector.extract_strided_slice %0 {offsets = [0, 10], sizes = [16, 1], strides = [1, 1]} : vector<16x16xi32> to vector<16x1xi32>
    %64 = vector.broadcast %63 : vector<16x1xi32> to vector<16x128xi32>
    %65 = arith.cmpi eq, %1, %64 : vector<16x128xi32>
    %66 = arith.extui %65 : vector<16x128xi1> to vector<16x128xi32>
    %67 = arith.sitofp %66 : vector<16x128xi32> to vector<16x128xf32>
    %68 = arith.addf %62, %67 : vector<16x128xf32>
    %69 = vector.extract_strided_slice %0 {offsets = [0, 11], sizes = [16, 1], strides = [1, 1]} : vector<16x16xi32> to vector<16x1xi32>
    %70 = vector.broadcast %69 : vector<16x1xi32> to vector<16x128xi32>
    %71 = arith.cmpi eq, %1, %70 : vector<16x128xi32>
    %72 = arith.extui %71 : vector<16x128xi1> to vector<16x128xi32>
    %73 = arith.sitofp %72 : vector<16x128xi32> to vector<16x128xf32>
    %74 = arith.addf %68, %73 : vector<16x128xf32>
    %75 = vector.extract_strided_slice %0 {offsets = [0, 12], sizes = [16, 1], strides = [1, 1]} : vector<16x16xi32> to vector<16x1xi32>
    %76 = vector.broadcast %75 : vector<16x1xi32> to vector<16x128xi32>
    %77 = arith.cmpi eq, %1, %76 : vector<16x128xi32>
    %78 = arith.extui %77 : vector<16x128xi1> to vector<16x128xi32>
    %79 = arith.sitofp %78 : vector<16x128xi32> to vector<16x128xf32>
    %80 = arith.addf %74, %79 : vector<16x128xf32>
    %81 = vector.extract_strided_slice %0 {offsets = [0, 13], sizes = [16, 1], strides = [1, 1]} : vector<16x16xi32> to vector<16x1xi32>
    %82 = vector.broadcast %81 : vector<16x1xi32> to vector<16x128xi32>
    %83 = arith.cmpi eq, %1, %82 : vector<16x128xi32>
    %84 = arith.extui %83 : vector<16x128xi1> to vector<16x128xi32>
    %85 = arith.sitofp %84 : vector<16x128xi32> to vector<16x128xf32>
    %86 = arith.addf %80, %85 : vector<16x128xf32>
    %87 = vector.extract_strided_slice %0 {offsets = [0, 14], sizes = [16, 1], strides = [1, 1]} : vector<16x16xi32> to vector<16x1xi32>
    %88 = vector.broadcast %87 : vector<16x1xi32> to vector<16x128xi32>
    %89 = arith.cmpi eq, %1, %88 : vector<16x128xi32>
    %90 = arith.extui %89 : vector<16x128xi1> to vector<16x128xi32>
    %91 = arith.sitofp %90 : vector<16x128xi32> to vector<16x128xf32>
    %92 = arith.addf %86, %91 : vector<16x128xf32>
    %93 = vector.extract_strided_slice %0 {offsets = [0, 15], sizes = [16, 1], strides = [1, 1]} : vector<16x16xi32> to vector<16x1xi32>
    %94 = vector.broadcast %93 : vector<16x1xi32> to vector<16x128xi32>
    %95 = arith.cmpi eq, %1, %94 : vector<16x128xi32>
    %96 = arith.extui %95 : vector<16x128xi1> to vector<16x128xi32>
    %97 = arith.sitofp %96 : vector<16x128xi32> to vector<16x128xf32>
    %98 = arith.addf %92, %97 : vector<16x128xf32>
    %99 = vector.extract_strided_slice %98 {offsets = [0, 0], sizes = [16, 1], strides = [1, 1]} : vector<16x128xf32> to vector<16x1xf32>
    %cst_1 = arith.constant 1.600000e+01 : f32
    %100 = vector.broadcast %cst_1 : f32 to vector<16x1xf32>
    %101 = arith.subf %100, %99 : vector<16x1xf32>
    %cst_2 = arith.constant 1.000000e+00 : f32
    %102 = vector.broadcast %cst_2 : f32 to vector<16x1xf32>
    %103 = arith.maximumf %101, %102 : vector<16x1xf32>
    %cst_3 = arith.constant 1.000000e+00 : f32
    %104 = vector.broadcast %cst_3 : f32 to vector<16x1xf32>
    %105 = arith.divf %104, %103 : vector<16x1xf32>
    %106 = math.log %103 : vector<16x1xf32>
    %c0_4 = arith.constant 0 : index
    %c0_5 = arith.constant 0 : index
    %107 = vector.load %arg2[%c0_4, %c0_5] : memref<16x8xf32, #tpu.memory_space<vmem>>, vector<16x8xf32>
    %108 = tpu.iota {dimensions = array<i32: 1>} : vector<16x8xi32>
    %c0_i32 = arith.constant 0 : i32
    %109 = vector.broadcast %c0_i32 : i32 to vector<16x8xi32>
    %110 = arith.cmpi eq, %108, %109 : vector<16x8xi32>
    %111 = vector.shape_cast %106 : vector<16x1xf32> to vector<16x1xf32>
    %112 = vector.broadcast %111 : vector<16x1xf32> to vector<16x8xf32>
    %113 = arith.select %110, %112, %107 : vector<16x8xi1>, vector<16x8xf32>
    %c0_6 = arith.constant 0 : index
    %c0_7 = arith.constant 0 : index
    %114 = vector.load %arg3[%c0_6, %c0_7] : memref<128x128xf32, #tpu.memory_space<vmem>>, vector<128x128xf32>
    %cst_8 = arith.constant dense<0.000000e+00> : vector<16x128xf32>
    %115 = tpu.matmul %98, %114, %cst_8 {dimension_numbers = #tpu.dot_dimension_numbers<[1], [0], [0], [1], [0, 0, 1, 1], [], []>} : vector<16x128xf32>, vector<128x128xf32>, vector<16x128xf32> -> vector<16x128xf32>
    %116 = vector.broadcast %105 : vector<16x1xf32> to vector<16x128xf32>
    %117 = arith.mulf %115, %116 : vector<16x128xf32>
    %c0_9 = arith.constant 0 : index
    %c0_10 = arith.constant 0 : index
    %118 = vector.load %arg4[%c0_9, %c0_10] : memref<8x128xf32, #tpu.memory_space<vmem>>, vector<8x128xf32>
    %cst_11 = arith.constant dense<0.000000e+00> : vector<16x128xf32>
    %119 = tpu.matmul %113, %118, %cst_11 {dimension_numbers = #tpu.dot_dimension_numbers<[1], [0], [0], [1], [0, 0, 1, 1], [], []>} : vector<16x8xf32>, vector<8x128xf32>, vector<16x128xf32> -> vector<16x128xf32>
    %120 = arith.addf %117, %119 : vector<16x128xf32>
    %c0_12 = arith.constant 0 : index
    %c0_13 = arith.constant 0 : index
    %121 = vector.load %arg5[%c0_12, %c0_13] : memref<1x128xf32, #tpu.memory_space<vmem>>, vector<1x128xf32>
    %122 = vector.broadcast %121 : vector<1x128xf32> to vector<16x128xf32>
    %123 = arith.addf %120, %122 : vector<16x128xf32>
    %cst_14 = arith.constant 0.000000e+00 : f32
    %124 = vector.broadcast %cst_14 : f32 to vector<16x128xf32>
    %125 = arith.maximumf %123, %124 : vector<16x128xf32>
    %c0_15 = arith.constant 0 : index
    %c0_16 = arith.constant 0 : index
    %126 = vector.load %arg6[%c0_15, %c0_16] : memref<128x256xf32, #tpu.memory_space<vmem>>, vector<128x256xf32>
    %cst_17 = arith.constant dense<0.000000e+00> : vector<16x256xf32>
    %127 = tpu.matmul %125, %126, %cst_17 {dimension_numbers = #tpu.dot_dimension_numbers<[1], [0], [0], [1], [0, 0, 1, 1], [], []>} : vector<16x128xf32>, vector<128x256xf32>, vector<16x256xf32> -> vector<16x256xf32>
    %c0_18 = arith.constant 0 : index
    %c0_19 = arith.constant 0 : index
    %128 = vector.load %arg7[%c0_18, %c0_19] : memref<1x256xf32, #tpu.memory_space<vmem>>, vector<1x256xf32>
    %129 = vector.broadcast %128 : vector<1x256xf32> to vector<16x256xf32>
    %130 = arith.addf %127, %129 : vector<16x256xf32>
    %131 = vector.extract_strided_slice %130 {offsets = [0, 0], sizes = [16, 128], strides = [1, 1]} : vector<16x256xf32> to vector<16x128xf32>
    %c0_20 = arith.constant 0 : index
    %c0_21 = arith.constant 0 : index
    %132 = vector.load %arg8[%c0_20, %c0_21] : memref<16x128xf32, #tpu.memory_space<vmem>>, vector<16x128xf32>
    tpu.vector_store %arg8[%c0_20, %c0_21], %131 {strides = array<i32>} : memref<16x128xf32, #tpu.memory_space<vmem>>, vector<16x128xf32>,
    %133 = vector.extract_strided_slice %130 {offsets = [0, 128], sizes = [16, 128], strides = [1, 1]} : vector<16x256xf32> to vector<16x128xf32>
    %cst_22 = arith.constant 0.000000e+00 : f32
    %134 = vector.broadcast %cst_22 : f32 to vector<16x128xf32>
    %135 = arith.maximumf %133, %134 : vector<16x128xf32>
    %136 = vector.broadcast %cst_22 : f32 to vector<16x128xf32>
    %137 = arith.subf %133, %136 : vector<16x128xf32>
    %138 = arith.cmpf one, %137, %137 : vector<16x128xf32>
    %139 = vector.broadcast %cst_22 : f32 to vector<16x128xf32>
    %140 = arith.addf %133, %139 : vector<16x128xf32>
    %141 = math.absf %137 : vector<16x128xf32>
    %cst_23 = arith.constant 0.000000e+00 : f32
    %142 = vector.broadcast %cst_23 : f32 to vector<16x128xf32>
    %143 = arith.subf %142, %141 : vector<16x128xf32>
    %144 = math.exp %143 : vector<16x128xf32>
    %145 = math.log1p %144 : vector<16x128xf32>
    %146 = arith.addf %135, %145 : vector<16x128xf32>
    %147 = arith.select %138, %140, %146 : vector<16x128xi1>, vector<16x128xf32>
    %c0_24 = arith.constant 0 : index
    %c0_25 = arith.constant 0 : index
    %148 = vector.load %arg9[%c0_24, %c0_25] : memref<16x128xf32, #tpu.memory_space<vmem>>, vector<16x128xf32>
    tpu.vector_store %arg9[%c0_24, %c0_25], %147 {strides = array<i32>} : memref<16x128xf32, #tpu.memory_space<vmem>>, vector<16x128xf32>,
    return
  }
  func.func @transform_0(%arg0: i32) -> (i32, i32) {
    %c0_i32 = arith.constant 0 : i32
    %c0_i32_0 = arith.constant 0 : i32
    return %arg0, %c0_i32 : i32, i32
  }
  func.func @transform_1(%arg0: i32) -> (i32, i32) {
    %c0_i32 = arith.constant 0 : i32
    %c0_i32_0 = arith.constant 0 : i32
    return %arg0, %c0_i32 : i32, i32
  }
  func.func @transform_2(%arg0: i32) -> (i32, i32) {
    %c0_i32 = arith.constant 0 : i32
    %c0_i32_0 = arith.constant 0 : i32
    %c0_i32_1 = arith.constant 0 : i32
    return %c0_i32, %c0_i32_0 : i32, i32
  }
  func.func @transform_3(%arg0: i32) -> (i32, i32) {
    %c0_i32 = arith.constant 0 : i32
    %c0_i32_0 = arith.constant 0 : i32
    %c0_i32_1 = arith.constant 0 : i32
    return %c0_i32, %c0_i32_0 : i32, i32
  }
  func.func @transform_4(%arg0: i32) -> (i32, i32) {
    %c0_i32 = arith.constant 0 : i32
    %c0_i32_0 = arith.constant 0 : i32
    %c0_i32_1 = arith.constant 0 : i32
    return %c0_i32, %c0_i32_0 : i32, i32
  }
  func.func @transform_5(%arg0: i32) -> (i32, i32) {
    %c0_i32 = arith.constant 0 : i32
    %c0_i32_0 = arith.constant 0 : i32
    %c0_i32_1 = arith.constant 0 : i32
    return %c0_i32, %c0_i32_0 : i32, i32
  }
  func.func @transform_6(%arg0: i32) -> (i32, i32) {
    %c0_i32 = arith.constant 0 : i32
    %c0_i32_0 = arith.constant 0 : i32
    %c0_i32_1 = arith.constant 0 : i32
    return %c0_i32, %c0_i32_0 : i32, i32
  }
  func.func @transform_7(%arg0: i32) -> (i32, i32) {
    %c0_i32 = arith.constant 0 : i32
    %c0_i32_0 = arith.constant 0 : i32
    return %arg0, %c0_i32 : i32, i32
  }
  func.func @transform_8(%arg0: i32) -> (i32, i32) {
    %c0_i32 = arith.constant 0 : i32
    %c0_i32_0 = arith.constant 0 : i32
    return %arg0, %c0_i32 : i32, i32
  }
}

</mosaic_0001>

<llo_original>
// kernel: tpu_custom_call.1
$region0: #{tpu_custom_call.1}
  #allocation0 [shape = 'u32[]', space=smem, size = 0x4, offset = 0x4, fixed_abs, tag = 'smem constant byte address 0x4 - core index']
  #allocation1 [shape = 'u32[144,128]{1,0:T(1,128)}', space=vmem, size = 0x12000, scoped, tag = 'internal scratch']
  %s0 = inlined_call_operand.vmem [shape: s32[16,16], index: 0, kind: input, shape index: {}]
  %s1 = inlined_call_operand.vmem [shape: f32[16,8], index: 1, kind: input, shape index: {}]
  %s2 = inlined_call_operand.hbm [shape: f32[128,128], index: 2, kind: input, shape index: {}]
  %s3 = inlined_call_operand.vmem [shape: f32[8,128], index: 3, kind: input, shape index: {}]
  %s4 = inlined_call_operand.vmem [shape: f32[1,128], index: 4, kind: input, shape index: {}]
  %s5 = inlined_call_operand.hbm [shape: f32[128,256], index: 5, kind: input, shape index: {}]
  %s6 = inlined_call_operand.vmem [shape: f32[1,256], index: 6, kind: input, shape index: {}]
  %s7 = inlined_call_operand.hbm [shape: f32[16,128], index: 7, kind: output, shape index: {0}]
  %s8 = inlined_call_operand.hbm [shape: f32[16,128], index: 8, kind: output, shape index: {1}]
  %9 = xla_tuple %s7, %s8
  %s10 = sld [smem:[#allocation0]]
  $region54: #{tpu_custom_call.1} parent=0
    _
  %s12 = ssub.s32 1, %s10
  %s13 = scalar_select 0, %s12, %s10
  $region1: #{tpu_custom_call.1} parent=0
    #allocation2 [shape = 'u8[65536]{0}', space=vmem, size = 0x10000, scoped, tag = 'input window, operand 2, single buffered']
    #allocation3 [shape = 's32[1]{0}', space=sflag, size = 0x4, scoped, tag = 'scoped memory for tpu_custom_call.1']
    #allocation4 [shape = 's32[1]{0}', space=sflag, size = 0x4, scoped, tag = 'scoped memory for tpu_custom_call.1']
    #allocation5 [shape = 'u8[131072]{0}', space=vmem, size = 0x20000, scoped, tag = 'input window, operand 5, single buffered']
    #allocation6 [shape = 's32[1]{0}', space=sflag, size = 0x4, scoped, tag = 'scoped memory for tpu_custom_call.1']
    #allocation7 [shape = 'u8[8192]{0}', space=vmem, size = 0x2000, scoped, tag = 'output window, operand 0, single buffered']
    #allocation8 [shape = 'u8[8192]{0}', space=vmem, size = 0x2000, scoped, tag = 'output window, operand 1, single buffered']
    #allocation9 [shape = 's32[1]{0}', space=sflag, size = 0x4, scoped, tag = 'scoped memory for tpu_custom_call.1']
    %14 = vsyncpa [#allocation3], 0
    %15 = vsyncpa [#allocation6], 0
    %16 = vsyncpa [#allocation4], 0
    %17 = vsyncpa [#allocation9], 0
    // Predicated region
    $region2: #{tpu_custom_call.1} parent=1 // pred_check
      _
    $region3: #{tpu_custom_call.1} parent=1 // pred_check_branch
      %19 = sbr.rel (0) target = $region5
    $region4: #{tpu_custom_call.1} parent=1 // pred_region
      _
    $region5: #{tpu_custom_call.1} parent=1 // pred_fallthru
      _
    // Predicated region
    $region6: #{tpu_custom_call.1} parent=1 // pred_check
      _
    $region7: #{tpu_custom_call.1} parent=1 // pred_check_branch
      %21 = sbr.rel (0) target = $region9
    $region8: #{tpu_custom_call.1} parent=1 // pred_region
      _
    $region9: #{tpu_custom_call.1} parent=1 // pred_fallthru
      _
    // Predicated region
    $region10: #{tpu_custom_call.1} parent=1 // pred_check
      _
    $region11: #{tpu_custom_call.1} parent=1 // pred_check_branch
      %23 = sbr.rel (0) target = $region13
    $region12: #{tpu_custom_call.1} parent=1 // pred_region
      %s25 = ssub.s32 2048, 2048
      %26 = vsyncadd [#allocation3], %s25
      %s27 = sshll.u32 [#allocation2], 4
      %s28 = int_to_ptr.vmem [resolvable:$true] %s27
      %33 = dma.hbm_to_vmem [thread:$0]  %s2, 2048, %s28, [#allocation3], 128, 128, 8
    $region13: #{tpu_custom_call.1} parent=1 // pred_fallthru
      _
    // Predicated region
    $region14: #{tpu_custom_call.1} parent=1 // pred_check
      _
    $region15: #{tpu_custom_call.1} parent=1 // pred_check_branch
      %35 = sbr.rel (0) target = $region17
    $region16: #{tpu_custom_call.1} parent=1 // pred_region
      _
    $region17: #{tpu_custom_call.1} parent=1 // pred_fallthru
      _
    // Predicated region
    $region18: #{tpu_custom_call.1} parent=1 // pred_check
      _
    $region19: #{tpu_custom_call.1} parent=1 // pred_check_branch
      %37 = sbr.rel (0) target = $region21
    $region20: #{tpu_custom_call.1} parent=1 // pred_region
      _
    $region21: #{tpu_custom_call.1} parent=1 // pred_fallthru
      _
    // Predicated region
    $region22: #{tpu_custom_call.1} parent=1 // pred_check
      _
    $region23: #{tpu_custom_call.1} parent=1 // pred_check_branch
      %39 = sbr.rel (0) target = $region25
    $region24: #{tpu_custom_call.1} parent=1 // pred_region
      %s41 = ssub.s32 4096, 4096
      %42 = vsyncadd [#allocation6], %s41
      %s43 = sshll.u32 [#allocation5], 4
      %s44 = int_to_ptr.vmem [resolvable:$true] %s43
      %49 = dma.hbm_to_vmem [thread:$0]  %s5, 4096, %s44, [#allocation6], 256, 256, 16
    $region25: #{tpu_custom_call.1} parent=1 // pred_fallthru
      _
    // Predicated region
    $region26: #{tpu_custom_call.1} parent=1 // pred_check
      _
    $region27: #{tpu_custom_call.1} parent=1 // pred_check_branch
      %51 = sbr.rel (0) target = $region29
    $region28: #{tpu_custom_call.1} parent=1 // pred_region
      _
    $region29: #{tpu_custom_call.1} parent=1 // pred_fallthru
      _
    // Predicated region
    $region30: #{tpu_custom_call.1} parent=1 // pred_check
      _
    $region31: #{tpu_custom_call.1} parent=1 // pred_check_branch
      %53 = sbr.rel (0) target = $region33
    $region32: #{tpu_custom_call.1} parent=1 // pred_region
      %54 = dma.done [#allocation3], 2048
    $region33: #{tpu_custom_call.1} parent=1 // pred_fallthru
      _
    // Predicated region
    $region34: #{tpu_custom_call.1} parent=1 // pred_check
      _
    $region35: #{tpu_custom_call.1} parent=1 // pred_check_branch
      %56 = sbr.rel (0) target = $region37
    $region36: #{tpu_custom_call.1} parent=1 // pred_region
      %57 = dma.done [#allocation6], 4096
    $region37: #{tpu_custom_call.1} parent=1 // pred_fallthru
      _
    %v58 = vld [vmem:[%s0] sm:$0xff]
    %v59 = vld [vmem:[%s0 + $0x8] sm:$0xff]
    %v60 = vlaneseq
    %v61 = vand.u32 %v60, 127
    %62 = vset.pattern.permute.xlu0 0
    %63 = vperm.xlu0 %62, %v58
    %v64 = vpop.permute.xlu0 %63
    %65 = vset.pattern.permute.xlu0 0
    %66 = vperm.xlu0 %65, %v59
    %v67 = vpop.permute.xlu0 %66
    %vm68 = vcmp.eq.s32.totalorder %v61, %v64
    %vm69 = vcmp.eq.s32.totalorder %v61, %v67
    %v70 = vsel %vm68, 1, 0
    %v71 = vsel %vm69, 1, 0
    %v72 = vcvt.s32.f32 %v70
    %v73 = vcvt.s32.f32 %v71
    %v74 = vadd.f32 %v72, 0.0
    %v75 = vadd.f32 %v73, 0.0
    %76 = vset.pattern.permute.xlu0 1
    %77 = vperm.xlu0 %76, %v58
    %v78 = vpop.permute.xlu0 %77
    %79 = vset.pattern.permute.xlu0 1
    %80 = vperm.xlu0 %79, %v59
    %v81 = vpop.permute.xlu0 %80
    %vm82 = vcmp.eq.s32.totalorder %v61, %v78
    %vm83 = vcmp.eq.s32.totalorder %v61, %v81
    %v84 = vsel %vm82, 1, 0
    %v85 = vsel %vm83, 1, 0
    %v86 = vcvt.s32.f32 %v84
    %v87 = vcvt.s32.f32 %v85
    %v88 = vadd.f32 %v74, %v86
    %v89 = vadd.f32 %v75, %v87
    %90 = vset.pattern.permute.xlu0 2
    %91 = vperm.xlu0 %90, %v58
    %v92 = vpop.permute.xlu0 %91
    %93 = vset.pattern.permute.xlu0 2
    %94 = vperm.xlu0 %93, %v59
    %v95 = vpop.permute.xlu0 %94
    %vm96 = vcmp.eq.s32.totalorder %v61, %v92
    %vm97 = vcmp.eq.s32.totalorder %v61, %v95
    %v98 = vsel %vm96, 1, 0
    %v99 = vsel %vm97, 1, 0
    %v100 = vcvt.s32.f32 %v98
    %v101 = vcvt.s32.f32 %v99
    %v102 = vadd.f32 %v88, %v100
    %v103 = vadd.f32 %v89, %v101
    %104 = vset.pattern.permute.xlu0 3
    %105 = vperm.xlu0 %104, %v58
    %v106 = vpop.permute.xlu0 %105
    %107 = vset.pattern.permute.xlu0 3
    %108 = vperm.xlu0 %107, %v59
    %v109 = vpop.permute.xlu0 %108
    %vm110 = vcmp.eq.s32.totalorder %v61, %v106
    %vm111 = vcmp.eq.s32.totalorder %v61, %v109
    %v112 = vsel %vm110, 1, 0
    %v113 = vsel %vm111, 1, 0
    %v114 = vcvt.s32.f32 %v112
    %v115 = vcvt.s32.f32 %v113
    %v116 = vadd.f32 %v102, %v114
    %v117 = vadd.f32 %v103, %v115
    %118 = vset.pattern.permute.xlu0 4
    %119 = vperm.xlu0 %118, %v58
    %v120 = vpop.permute.xlu0 %119
    %121 = vset.pattern.permute.xlu0 4
    %122 = vperm.xlu0 %121, %v59
    %v123 = vpop.permute.xlu0 %122
    %vm124 = vcmp.eq.s32.totalorder %v61, %v120
    %vm125 = vcmp.eq.s32.totalorder %v61, %v123
    %v126 = vsel %vm124, 1, 0
    %v127 = vsel %vm125, 1, 0
    %v128 = vcvt.s32.f32 %v126
    %v129 = vcvt.s32.f32 %v127
    %v130 = vadd.f32 %v116, %v128
    %v131 = vadd.f32 %v117, %v129
    %132 = vset.pattern.permute.xlu0 5
    %133 = vperm.xlu0 %132, %v58
    %v134 = vpop.permute.xlu0 %133
    %135 = vset.pattern.permute.xlu0 5
    %136 = vperm.xlu0 %135, %v59
    %v137 = vpop.permute.xlu0 %136
    %vm138 = vcmp.eq.s32.totalorder %v61, %v134
    %vm139 = vcmp.eq.s32.totalorder %v61, %v137
    %v140 = vsel %vm138, 1, 0
    %v141 = vsel %vm139, 1, 0
    %v142 = vcvt.s32.f32 %v140
    %v143 = vcvt.s32.f32 %v141
    %v144 = vadd.f32 %v130, %v142
    %v145 = vadd.f32 %v131, %v143
    %146 = vset.pattern.permute.xlu0 6
    %147 = vperm.xlu0 %146, %v58
    %v148 = vpop.permute.xlu0 %147
    %149 = vset.pattern.permute.xlu0 6
    %150 = vperm.xlu0 %149, %v59
    %v151 = vpop.permute.xlu0 %150
    %vm152 = vcmp.eq.s32.totalorder %v61, %v148
    %vm153 = vcmp.eq.s32.totalorder %v61, %v151
    %v154 = vsel %vm152, 1, 0
    %v155 = vsel %vm153, 1, 0
    %v156 = vcvt.s32.f32 %v154
    %v157 = vcvt.s32.f32 %v155
    %v158 = vadd.f32 %v144, %v156
    %v159 = vadd.f32 %v145, %v157
    %160 = vset.pattern.permute.xlu0 7
    %161 = vperm.xlu0 %160, %v58
    %v162 = vpop.permute.xlu0 %161
    %163 = vset.pattern.permute.xlu0 7
    %164 = vperm.xlu0 %163, %v59
    %v165 = vpop.permute.xlu0 %164
    %vm166 = vcmp.eq.s32.totalorder %v61, %v162
    %vm167 = vcmp.eq.s32.totalorder %v61, %v165
    %v168 = vsel %vm166, 1, 0
    %v169 = vsel %vm167, 1, 0
    %v170 = vcvt.s32.f32 %v168
    %v171 = vcvt.s32.f32 %v169
    %v172 = vadd.f32 %v158, %v170
    %v173 = vadd.f32 %v159, %v171
    %174 = vset.pattern.permute.xlu0 8
    %175 = vperm.xlu0 %174, %v58
    %v176 = vpop.permute.xlu0 %175
    %177 = vset.pattern.permute.xlu0 8
    %178 = vperm.xlu0 %177, %v59
    %v179 = vpop.permute.xlu0 %178
    %vm180 = vcmp.eq.s32.totalorder %v61, %v176
    %vm181 = vcmp.eq.s32.totalorder %v61, %v179
    %v182 = vsel %vm180, 1, 0
    %v183 = vsel %vm181, 1, 0
    %v184 = vcvt.s32.f32 %v182
    %v185 = vcvt.s32.f32 %v183
    %v186 = vadd.f32 %v172, %v184
    %v187 = vadd.f32 %v173, %v185
    %188 = vset.pattern.permute.xlu0 9
    %189 = vperm.xlu0 %188, %v58
    %v190 = vpop.permute.xlu0 %189
    %191 = vset.pattern.permute.xlu0 9
    %192 = vperm.xlu0 %191, %v59
    %v193 = vpop.permute.xlu0 %192
    %vm194 = vcmp.eq.s32.totalorder %v61, %v190
    %vm195 = vcmp.eq.s32.totalorder %v61, %v193
    %v196 = vsel %vm194, 1, 0
    %v197 = vsel %vm195, 1, 0
    %v198 = vcvt.s32.f32 %v196
    %v199 = vcvt.s32.f32 %v197
    %v200 = vadd.f32 %v186, %v198
    %v201 = vadd.f32 %v187, %v199
    %202 = vset.pattern.permute.xlu0 10
    %203 = vperm.xlu0 %202, %v58
    %v204 = vpop.permute.xlu0 %203
    %205 = vset.pattern.permute.xlu0 10
    %206 = vperm.xlu0 %205, %v59
    %v207 = vpop.permute.xlu0 %206
    %vm208 = vcmp.eq.s32.totalorder %v61, %v204
    %vm209 = vcmp.eq.s32.totalorder %v61, %v207
    %v210 = vsel %vm208, 1, 0
    %v211 = vsel %vm209, 1, 0
    %v212 = vcvt.s32.f32 %v210
    %v213 = vcvt.s32.f32 %v211
    %v214 = vadd.f32 %v200, %v212
    %v215 = vadd.f32 %v201, %v213
    %216 = vset.pattern.permute.xlu0 11
    %217 = vperm.xlu0 %216, %v58
    %v218 = vpop.permute.xlu0 %217
    %219 = vset.pattern.permute.xlu0 11
    %220 = vperm.xlu0 %219, %v59
    %v221 = vpop.permute.xlu0 %220
    %vm222 = vcmp.eq.s32.totalorder %v61, %v218
    %vm223 = vcmp.eq.s32.totalorder %v61, %v221
    %v224 = vsel %vm222, 1, 0
    %v225 = vsel %vm223, 1, 0
    %v226 = vcvt.s32.f32 %v224
    %v227 = vcvt.s32.f32 %v225
    %v228 = vadd.f32 %v214, %v226
    %v229 = vadd.f32 %v215, %v227
    %230 = vset.pattern.permute.xlu0 12
    %231 = vperm.xlu0 %230, %v58
    %v232 = vpop.permute.xlu0 %231
    %233 = vset.pattern.permute.xlu0 12
    %234 = vperm.xlu0 %233, %v59
    %v235 = vpop.permute.xlu0 %234
    %vm236 = vcmp.eq.s32.totalorder %v61, %v232
    %vm237 = vcmp.eq.s32.totalorder %v61, %v235
    %v238 = vsel %vm236, 1, 0
    %v239 = vsel %vm237, 1, 0
    %v240 = vcvt.s32.f32 %v238
    %v241 = vcvt.s32.f32 %v239
    %v242 = vadd.f32 %v228, %v240
    %v243 = vadd.f32 %v229, %v241
    %244 = vset.pattern.permute.xlu0 13
    %245 = vperm.xlu0 %244, %v58
    %v246 = vpop.permute.xlu0 %245
    %247 = vset.pattern.permute.xlu0 13
    %248 = vperm.xlu0 %247, %v59
    %v249 = vpop.permute.xlu0 %248
    %vm250 = vcmp.eq.s32.totalorder %v61, %v246
    %vm251 = vcmp.eq.s32.totalorder %v61, %v249
    %v252 = vsel %vm250, 1, 0
    %v253 = vsel %vm251, 1, 0
    %v254 = vcvt.s32.f32 %v252
    %v255 = vcvt.s32.f32 %v253
    %v256 = vadd.f32 %v242, %v254
    %v257 = vadd.f32 %v243, %v255
    %258 = vset.pattern.permute.xlu0 14
    %259 = vperm.xlu0 %258, %v58
    %v260 = vpop.permute.xlu0 %259
    %261 = vset.pattern.permute.xlu0 14
    %262 = vperm.xlu0 %261, %v59
    %v263 = vpop.permute.xlu0 %262
    %vm264 = vcmp.eq.s32.totalorder %v61, %v260
    %vm265 = vcmp.eq.s32.totalorder %v61, %v263
    %v266 = vsel %vm264, 1, 0
    %v267 = vsel %vm265, 1, 0
    %v268 = vcvt.s32.f32 %v266
    %v269 = vcvt.s32.f32 %v267
    %v270 = vadd.f32 %v256, %v268
    %v271 = vadd.f32 %v257, %v269
    %272 = vset.pattern.permute.xlu0 15
    %273 = vperm.xlu0 %272, %v58
    %v274 = vpop.permute.xlu0 %273
    %275 = vset.pattern.permute.xlu0 15
    %276 = vperm.xlu0 %275, %v59
    %v277 = vpop.permute.xlu0 %276
    %vm278 = vcmp.eq.s32.totalorder %v61, %v274
    %vm279 = vcmp.eq.s32.totalorder %v61, %v277
    %v280 = vsel %vm278, 1, 0
    %v281 = vsel %vm279, 1, 0
    %v282 = vcvt.s32.f32 %v280
    %v283 = vcvt.s32.f32 %v281
    %v284 = vadd.f32 %v270, %v282
    %v285 = vadd.f32 %v271, %v283
    %v286 = vsub.f32 16.0, %v284
    %v287 = vsub.f32 16.0, %v285
    %v288 = vmax.f32 %v286, 1.0
    %v289 = vmax.f32 %v287, 1.0
    %v290 = vrcp.pop %v288
    %v291 = vmul.f32 1.0, %v290
    %v292 = vrcp.pop %v289
    %v293 = vmul.f32 1.0, %v292
    %v294 = vlog2.pop %v288
    %v295 = vmul.f32 %v294, 0.6931472
    %v296 = vlog2.pop %v289
    %v297 = vmul.f32 %v296, 0.6931472
    %v298 = vld [vmem:[%s1] sm:$0xff]
    %v299 = vld [vmem:[%s1 + $0x8] sm:$0xff]
    %vm300 = vcmp.eq.s32.totalorder %v61, 0
    %302 = vset.pattern.permute.xlu0 0
    %303 = vperm.xlu0 %302, %v295
    %v304 = vpop.permute.xlu0 %303
    %307 = vset.pattern.permute.xlu0 0
    %308 = vperm.xlu0 %307, %v297
    %v309 = vpop.permute.xlu0 %308
    %v311 = vsel %vm300, %v304, %v298
    %v312 = vsel %vm300, %v309, %v299
    %v313 = vld [vmem:[#allocation2] sm:$0xff]
    %v314 = vld [vmem:[#allocation2 + $0x8] sm:$0xff]
    %v315 = vld [vmem:[#allocation2 + $0x10] sm:$0xff]
    %v316 = vld [vmem:[#allocation2 + $0x18] sm:$0xff]
    %v317 = vld [vmem:[#allocation2 + $0x20] sm:$0xff]
    %v318 = vld [vmem:[#allocation2 + $0x28] sm:$0xff]
    %v319 = vld [vmem:[#allocation2 + $0x30] sm:$0xff]
    %v320 = vld [vmem:[#allocation2 + $0x38] sm:$0xff]
    %v321 = vld [vmem:[#allocation2 + $0x40] sm:$0xff]
    %v322 = vld [vmem:[#allocation2 + $0x48] sm:$0xff]
    %v323 = vld [vmem:[#allocation2 + $0x50] sm:$0xff]
    %v324 = vld [vmem:[#allocation2 + $0x58] sm:$0xff]
    %v325 = vld [vmem:[#allocation2 + $0x60] sm:$0xff]
    %v326 = vld [vmem:[#allocation2 + $0x68] sm:$0xff]
    %v327 = vld [vmem:[#allocation2 + $0x70] sm:$0xff]
    %v328 = vld [vmem:[#allocation2 + $0x78] sm:$0xff]
    %329 = vmatprep.subr.mxu0 0.0
    %330 = vmatpush1.msra.mxu0 %v313
    %331 = vmatprep.subr.mxu0 0.0
    %332 = vmatpush1.msra.mxu0 %v314
    %333 = vmatprep.subr.mxu0 0.0
    %334 = vmatpush1.msra.mxu0 %v315
    %335 = vmatprep.subr.mxu0 0.0
    %336 = vmatpush1.msra.mxu0 %v316
    %337 = vmatprep.subr.mxu0 0.0
    %338 = vmatpush1.msra.mxu0 %v317
    %339 = vmatprep.subr.mxu0 0.0
    %340 = vmatpush1.msra.mxu0 %v318
    %341 = vmatprep.subr.mxu0 0.0
    %342 = vmatpush1.msra.mxu0 %v319
    %343 = vmatprep.subr.mxu0 0.0
    %344 = vmatpush1.msra.mxu0 %v320
    %345 = vmatprep.subr.mxu0 0.0
    %346 = vmatpush1.msra.mxu0 %v321
    %347 = vmatprep.subr.mxu0 0.0
    %348 = vmatpush1.msra.mxu0 %v322
    %349 = vmatprep.subr.mxu0 0.0
    %350 = vmatpush1.msra.mxu0 %v323
    %351 = vmatprep.subr.mxu0 0.0
    %352 = vmatpush1.msra.mxu0 %v324
    %353 = vmatprep.subr.mxu0 0.0
    %354 = vmatpush1.msra.mxu0 %v325
    %355 = vmatprep.subr.mxu0 0.0
    %356 = vmatpush1.msra.mxu0 %v326
    %357 = vmatprep.subr.mxu0 0.0
    %358 = vmatpush1.msra.mxu0 %v327
    %359 = vmatprep.subr.mxu0 0.0
    %360 = vmatpush1.msra.mxu0 %v328
    %361 = vmatprep.subr.mxu0 0.0
    %362 = vmatpush1.msra.mxu0 0.0
    %363 = vmatprep.subr.mxu0 0.0
    %364 = vmatpush1.msra.mxu0 0.0
    %365 = vmatprep.subr.mxu0 0.0
    %366 = vmatpush1.msra.mxu0 0.0
    %367 = vmatprep.subr.mxu0 0.0
    %368 = vmatpush1.msra.mxu0 0.0
    %369 = vmatprep.subr.mxu0 0.0
    %370 = vmatpush1.msra.mxu0 0.0
    %371 = vmatprep.subr.mxu0 0.0
    %372 = vmatpush1.msra.mxu0 0.0
    %373 = vmatprep.subr.mxu0 0.0
    %374 = vmatpush1.msra.mxu0 0.0
    %375 = vmatprep.subr.mxu0 0.0
    %376 = vmatpush1.msra.mxu0 0.0
    %377 = vmatprep.subr.mxu0 0.0
    %378 = vmatpush1.msra.mxu0 0.0
    %379 = vmatprep.subr.mxu0 0.0
    %380 = vmatpush1.msra.mxu0 0.0
    %381 = vmatprep.subr.mxu0 0.0
    %382 = vmatpush1.msra.mxu0 0.0
    %383 = vmatprep.subr.mxu0 0.0
    %384 = vmatpush1.msra.mxu0 0.0
    %385 = vmatprep.subr.mxu0 0.0
    %386 = vmatpush1.msra.mxu0 0.0
    %387 = vmatprep.subr.mxu0 0.0
    %388 = vmatpush1.msra.mxu0 0.0
    %389 = vmatprep.subr.mxu0 0.0
    %390 = vmatpush1.msra.mxu0 0.0
    %391 = vmatprep.subr.mxu0 0.0
    %392 = vmatpush1.msra.mxu0 0.0
    %393 = vmatprep.mubr.f32.mxu0 0.0
    %394 = vmatmul.mubr.f32.gmra.mrb[0].mxu0 %v284
    %v395 = vpop.f32.mrb[0].mxu0
    %v396 = vadd.f32 0.0, %v395
    %v397 = vpop.f32.mrb[0].mxu0
    %398 = vmatprep.mubr.f32.mxu0 0.0
    %399 = vmatmul.mubr.f32.gmra.mrb[0].mxu0 %v285
    %v400 = vpop.f32.mrb[0].mxu0
    %v401 = vadd.f32 0.0, %v400
    %v402 = vpop.f32.mrb[0].mxu0
    %403 = vdwg.mxu0
    %405 = vset.pattern.permute.xlu0 0
    %406 = vperm.xlu0 %405, %v291
    %v407 = vpop.permute.xlu0 %406
    %410 = vset.pattern.permute.xlu0 0
    %411 = vperm.xlu0 %410, %v293
    %v412 = vpop.permute.xlu0 %411
    %v414 = vmul.f32 %v396, %v407
    %v415 = vmul.f32 %v401, %v412
    %v416 = vld [vmem:[%s3] sm:$0xff]
    %vm417 = vcmask 64512
    %v419 = vsel %vm417, %v311, 0
    %v422 = vsel %vm417, %v312, 0
    %424 = vmatprep.subr.mxu0 0.0
    %425 = vmatpush1.msra.mxu0 %v416
    %426 = vmatprep.subr.mxu0 0.0
    %427 = vmatpush1.msra.mxu0 0.0
    %428 = vmatprep.subr.mxu0 0.0
    %429 = vmatpush1.msra.mxu0 0.0
    %430 = vmatprep.subr.mxu0 0.0
    %431 = vmatpush1.msra.mxu0 0.0
    %432 = vmatprep.subr.mxu0 0.0
    %433 = vmatpush1.msra.mxu0 0.0
    %434 = vmatprep.subr.mxu0 0.0
    %435 = vmatpush1.msra.mxu0 0.0
    %436 = vmatprep.subr.mxu0 0.0
    %437 = vmatpush1.msra.mxu0 0.0
    %438 = vmatprep.subr.mxu0 0.0
    %439 = vmatpush1.msra.mxu0 0.0
    %440 = vmatprep.subr.mxu0 0.0
    %441 = vmatpush1.msra.mxu0 0.0
    %442 = vmatprep.subr.mxu0 0.0
    %443 = vmatpush1.msra.mxu0 0.0
    %444 = vmatprep.subr.mxu0 0.0
    %445 = vmatpush1.msra.mxu0 0.0
    %446 = vmatprep.subr.mxu0 0.0
    %447 = vmatpush1.msra.mxu0 0.0
    %448 = vmatprep.subr.mxu0 0.0
    %449 = vmatpush1.msra.mxu0 0.0
    %450 = vmatprep.subr.mxu0 0.0
    %451 = vmatpush1.msra.mxu0 0.0
    %452 = vmatprep.subr.mxu0 0.0
    %453 = vmatpush1.msra.mxu0 0.0
    %454 = vmatprep.subr.mxu0 0.0
    %455 = vmatpush1.msra.mxu0 0.0
    %456 = vmatprep.subr.mxu0 0.0
    %457 = vmatpush1.msra.mxu0 0.0
    %458 = vmatprep.subr.mxu0 0.0
    %459 = vmatpush1.msra.mxu0 0.0
    %460 = vmatprep.subr.mxu0 0.0
    %461 = vmatpush1.msra.mxu0 0.0
    %462 = vmatprep.subr.mxu0 0.0
    %463 = vmatpush1.msra.mxu0 0.0
    %464 = vmatprep.subr.mxu0 0.0
    %465 = vmatpush1.msra.mxu0 0.0
    %466 = vmatprep.subr.mxu0 0.0
    %467 = vmatpush1.msra.mxu0 0.0
    %468 = vmatprep.subr.mxu0 0.0
    %469 = vmatpush1.msra.mxu0 0.0
    %470 = vmatprep.subr.mxu0 0.0
    %471 = vmatpush1.msra.mxu0 0.0
    %472 = vmatprep.subr.mxu0 0.0
    %473 = vmatpush1.msra.mxu0 0.0
    %474 = vmatprep.subr.mxu0 0.0
    %475 = vmatpush1.msra.mxu0 0.0
    %476 = vmatprep.subr.mxu0 0.0
    %477 = vmatpush1.msra.mxu0 0.0
    %478 = vmatprep.subr.mxu0 0.0
    %479 = vmatpush1.msra.mxu0 0.0
    %480 = vmatprep.subr.mxu0 0.0
    %481 = vmatpush1.msra.mxu0 0.0
    %482 = vmatprep.subr.mxu0 0.0
    %483 = vmatpush1.msra.mxu0 0.0
    %484 = vmatprep.subr.mxu0 0.0
    %485 = vmatpush1.msra.mxu0 0.0
    %486 = vmatprep.subr.mxu0 0.0
    %487 = vmatpush1.msra.mxu0 0.0
    %488 = vmatprep.mubr.f32.mxu0 0.0
    %489 = vmatmul.mubr.f32.gmra.mrb[0].mxu0 %v419
    %v490 = vpop.f32.mrb[0].mxu0
    %v491 = vadd.f32 0.0, %v490
    %v492 = vpop.f32.mrb[0].mxu0
    %493 = vmatprep.mubr.f32.mxu0 0.0
    %494 = vmatmul.mubr.f32.gmra.mrb[0].mxu0 %v422
    %v495 = vpop.f32.mrb[0].mxu0
    %v496 = vadd.f32 0.0, %v495
    %v497 = vpop.f32.mrb[0].mxu0
    %498 = vdwg.mxu0
    %v499 = vadd.f32 %v414, %v491
    %v500 = vadd.f32 %v415, %v496
    %v501 = vld [vmem:[%s4] sm:$0x1]
    %v503 = vlaneseq
    %v504 = vshrl.u32 %v503, 7
    %v505 = vsub.s32 0, %v504
    %v506 = vrot.slane %v501, %v505
    %v508 = vadd.f32 %v499, %v506
    %v509 = vadd.f32 %v500, %v506
    %v510 = vmax.f32 %v508, 0.0
    %v511 = vmax.f32 %v509, 0.0
    %v512 = vld [vmem:[#allocation5] sm:$0xff]
    %v513 = vld [vmem:[#allocation5 + $0x8] sm:$0xff]
    %v514 = vld [vmem:[#allocation5 + $0x10] sm:$0xff]
    %v515 = vld [vmem:[#allocation5 + $0x18] sm:$0xff]
    %v516 = vld [vmem:[#allocation5 + $0x20] sm:$0xff]
    %v517 = vld [vmem:[#allocation5 + $0x28] sm:$0xff]
    %v518 = vld [vmem:[#allocation5 + $0x30] sm:$0xff]
    %v519 = vld [vmem:[#allocation5 + $0x38] sm:$0xff]
    %v520 = vld [vmem:[#allocation5 + $0x40] sm:$0xff]
    %v521 = vld [vmem:[#allocation5 + $0x48] sm:$0xff]
    %v522 = vld [vmem:[#allocation5 + $0x50] sm:$0xff]
    %v523 = vld [vmem:[#allocation5 + $0x58] sm:$0xff]
    %v524 = vld [vmem:[#allocation5 + $0x60] sm:$0xff]
    %v525 = vld [vmem:[#allocation5 + $0x68] sm:$0xff]
    %v526 = vld [vmem:[#allocation5 + $0x70] sm:$0xff]
    %v527 = vld [vmem:[#allocation5 + $0x78] sm:$0xff]
    %v528 = vld [vmem:[#allocation5 + $0x80] sm:$0xff]
    %v529 = vld [vmem:[#allocation5 + $0x88] sm:$0xff]
    %v530 = vld [vmem:[#allocation5 + $0x90] sm:$0xff]
    %v531 = vld [vmem:[#allocation5 + $0x98] sm:$0xff]
    %v532 = vld [vmem:[#allocation5 + $0xa0] sm:$0xff]
    %v533 = vld [vmem:[#allocation5 + $0xa8] sm:$0xff]
    %v534 = vld [vmem:[#allocation5 + $0xb0] sm:$0xff]
    %v535 = vld [vmem:[#allocation5 + $0xb8] sm:$0xff]
    %v536 = vld [vmem:[#allocation5 + $0xc0] sm:$0xff]
    %v537 = vld [vmem:[#allocation5 + $0xc8] sm:$0xff]
    %v538 = vld [vmem:[#allocation5 + $0xd0] sm:$0xff]
    %v539 = vld [vmem:[#allocation5 + $0xd8] sm:$0xff]
    %v540 = vld [vmem:[#allocation5 + $0xe0] sm:$0xff]
    %v541 = vld [vmem:[#allocation5 + $0xe8] sm:$0xff]
    %v542 = vld [vmem:[#allocation5 + $0xf0] sm:$0xff]
    %v543 = vld [vmem:[#allocation5 + $0xf8] sm:$0xff]
    %v544 = vld [vmem:[%s6] sm:$0x3]
    %v546 = vlaneseq
    %v547 = vshrl.u32 %v546, 7
    %v548 = vsub.s32 0, %v547
    %v549 = vrot.slane %v544, %v548
    %v550 = vlaneseq
    %v551 = vshrl.u32 %v550, 7
    %v552 = vsub.s32 1, %v551
    %v553 = vrot.slane %v544, %v552
    %556 = vmatprep.subr.mxu0 %v513
    %557 = vmatpush1.msra.mxu0 %v512
    %558 = vmatprep.subr.mxu0 %v515
    %559 = vmatpush1.msra.mxu0 %v514
    %560 = vmatprep.subr.mxu0 %v517
    %561 = vmatpush1.msra.mxu0 %v516
    %562 = vmatprep.subr.mxu0 %v519
    %563 = vmatpush1.msra.mxu0 %v518
    %564 = vmatprep.subr.mxu0 %v521
    %565 = vmatpush1.msra.mxu0 %v520
    %566 = vmatprep.subr.mxu0 %v523
    %567 = vmatpush1.msra.mxu0 %v522
    %568 = vmatprep.subr.mxu0 %v525
    %569 = vmatpush1.msra.mxu0 %v524
    %570 = vmatprep.subr.mxu0 %v527
    %571 = vmatpush1.msra.mxu0 %v526
    %572 = vmatprep.subr.mxu0 %v529
    %573 = vmatpush1.msra.mxu0 %v528
    %574 = vmatprep.subr.mxu0 %v531
    %575 = vmatpush1.msra.mxu0 %v530
    %576 = vmatprep.subr.mxu0 %v533
    %577 = vmatpush1.msra.mxu0 %v532
    %578 = vmatprep.subr.mxu0 %v535
    %579 = vmatpush1.msra.mxu0 %v534
    %580 = vmatprep.subr.mxu0 %v537
    %581 = vmatpush1.msra.mxu0 %v536
    %582 = vmatprep.subr.mxu0 %v539
    %583 = vmatpush1.msra.mxu0 %v538
    %584 = vmatprep.subr.mxu0 %v541
    %585 = vmatpush1.msra.mxu0 %v540
    %586 = vmatprep.subr.mxu0 %v543
    %587 = vmatpush1.msra.mxu0 %v542
    %588 = vmatprep.subr.mxu0 0.0
    %589 = vmatpush1.msra.mxu0 0.0
    %590 = vmatprep.subr.mxu0 0.0
    %591 = vmatpush1.msra.mxu0 0.0
    %592 = vmatprep.subr.mxu0 0.0
    %593 = vmatpush1.msra.mxu0 0.0
    %594 = vmatprep.subr.mxu0 0.0
    %595 = vmatpush1.msra.mxu0 0.0
    %596 = vmatprep.subr.mxu0 0.0
    %597 = vmatpush1.msra.mxu0 0.0
    %598 = vmatprep.subr.mxu0 0.0
    %599 = vmatpush1.msra.mxu0 0.0
    %600 = vmatprep.subr.mxu0 0.0
    %601 = vmatpush1.msra.mxu0 0.0
    %602 = vmatprep.subr.mxu0 0.0
    %603 = vmatpush1.msra.mxu0 0.0
    %604 = vmatprep.subr.mxu0 0.0
    %605 = vmatpush1.msra.mxu0 0.0
    %606 = vmatprep.subr.mxu0 0.0
    %607 = vmatpush1.msra.mxu0 0.0
    %608 = vmatprep.subr.mxu0 0.0
    %609 = vmatpush1.msra.mxu0 0.0
    %610 = vmatprep.subr.mxu0 0.0
    %611 = vmatpush1.msra.mxu0 0.0
    %612 = vmatprep.subr.mxu0 0.0
    %613 = vmatpush1.msra.mxu0 0.0
    %614 = vmatprep.subr.mxu0 0.0
    %615 = vmatpush1.msra.mxu0 0.0
    %616 = vmatprep.subr.mxu0 0.0
    %617 = vmatpush1.msra.mxu0 0.0
    %618 = vmatprep.subr.mxu0 0.0
    %619 = vmatpush1.msra.mxu0 0.0
    %620 = vmatprep.mubr.f32.mxu0 0.0
    %621 = vmatmul.mubr.f32.gmra.mrb[0].mxu0 %v510
    %v622 = vpop.f32.mrb[0].mxu0
    %v623 = vadd.f32 %v549, %v622
    %v624 = vpop.f32.mrb[0].mxu0
    %v625 = vadd.f32 %v553, %v624
    %626 = vmatprep.mubr.f32.mxu0 0.0
    %627 = vmatmul.mubr.f32.gmra.mrb[0].mxu0 %v511
    %v628 = vpop.f32.mrb[0].mxu0
    %v629 = vadd.f32 %v549, %v628
    %v630 = vpop.f32.mrb[0].mxu0
    %v631 = vadd.f32 %v553, %v630
    %632 = vdwg.mxu0
    %633 = vst [vmem:[#allocation7] sm:$0xff] %v623
    %634 = vst [vmem:[#allocation7 + $0x8] sm:$0xff] %v629
    %v635 = vmax.f32 %v625, 0.0
    %v636 = vmax.f32 %v631, 0.0
    %vm637 = vcmp.ne.f32.partialorder %v625, %v625
    %vm638 = vcmp.ne.f32.partialorder %v631, %v631
    %v639 = vadd.f32 %v625, 0.0
    %v640 = vadd.f32 %v631, 0.0
    %v641 = vand.u32 2147483647, %v625
    %v642 = vand.u32 2147483647, %v631
    %v643 = vsub.f32 0.0, %v641
    %v644 = vsub.f32 0.0, %v642
    %v645 = vmul.f32 %v643, 1.442695
    %v646 = vpow.pop %v645
    %v647 = vmul.f32 %v644, 1.442695
    %v648 = vpow.pop %v647
    %v649 = vadd.f32 %v646, 1.0
    %v650 = vlog2.pop %v649
    %v651 = vmul.f32 %v650, 0.6931472
    %v652 = vmul.f32 -0.5, %v646
    %v653 = vadd.f32 %v652, 1.0
    %v654 = vmul.f32 %v653, %v646
    %v655 = vand.u32 2147483647, %v646
    %vm656 = vcmp.lt.f32.partialorder %v655, 0.0004427343
    %v657 = vsel %vm656, %v654, %v651
    %v658 = vadd.f32 %v648, 1.0
    %v659 = vlog2.pop %v658
    %v660 = vmul.f32 %v659, 0.6931472
    %v661 = vmul.f32 -0.5, %v648
    %v662 = vadd.f32 %v661, 1.0
    %v663 = vmul.f32 %v662, %v648
    %v664 = vand.u32 2147483647, %v648
    %vm665 = vcmp.lt.f32.partialorder %v664, 0.0004427343
    %v666 = vsel %vm665, %v663, %v660
    %v667 = vadd.f32 %v635, %v657
    %v668 = vadd.f32 %v636, %v666
    %v669 = vsel %vm637, %v639, %v667
    %v670 = vsel %vm638, %v640, %v668
    %671 = vst [vmem:[#allocation8] sm:$0xff] %v669
    %672 = vst [vmem:[#allocation8 + $0x8] sm:$0xff] %v670
    // Predicated region
    $region38: #{tpu_custom_call.1} parent=1 // pred_check
      _
    $region39: #{tpu_custom_call.1} parent=1 // pred_check_branch
      %674 = sbr.rel (0) target = $region41
    $region40: #{tpu_custom_call.1} parent=1 // pred_region
      %s676 = ssub.s32 256, 256
      %677 = vsyncadd [#allocation4], %s676
      %s678 = sshll.u32 [#allocation7], 4
      %s679 = int_to_ptr.vmem [resolvable:$true] %s678
      %684 = dma.vmem_to_hbm [thread:$0]  %s679, 256, %s7, [#allocation4], 128, 128, 8
    $region41: #{tpu_custom_call.1} parent=1 // pred_fallthru
      _
    // Predicated region
    $region42: #{tpu_custom_call.1} parent=1 // pred_check
      _
    $region43: #{tpu_custom_call.1} parent=1 // pred_check_branch
      %686 = sbr.rel (0) target = $region45
    $region44: #{tpu_custom_call.1} parent=1 // pred_region
      %s688 = ssub.s32 256, 256
      %689 = vsyncadd [#allocation9], %s688
      %s690 = sshll.u32 [#allocation8], 4
      %s691 = int_to_ptr.vmem [resolvable:$true] %s690
      %696 = dma.vmem_to_hbm [thread:$0]  %s691, 256, %s8, [#allocation9], 128, 128, 8
    $region45: #{tpu_custom_call.1} parent=1 // pred_fallthru
      _
    // Predicated region
    $region46: #{tpu_custom_call.1} parent=1 // pred_check
      _
    $region47: #{tpu_custom_call.1} parent=1 // pred_check_branch
      %698 = sbr.rel (0) target = $region49
    $region48: #{tpu_custom_call.1} parent=1 // pred_region
      %699 = dma.done [#allocation4], 256
    $region49: #{tpu_custom_call.1} parent=1 // pred_fallthru
      _
    // Predicated region
    $region50: #{tpu_custom_call.1} parent=1 // pred_check
      _
    $region51: #{tpu_custom_call.1} parent=1 // pred_check_branch
      %701 = sbr.rel (0) target = $region53
    $region52: #{tpu_custom_call.1} parent=1 // pred_region
      %702 = dma.done [#allocation9], 256
    $region53: #{tpu_custom_call.1} parent=1 // pred_fallthru
      _
    %703 = vsyncpa [#allocation3], 1
    %704 = vsyncpa [#allocation6], 1
    %705 = vsyncpa [#allocation4], 1
    %706 = vsyncpa [#allocation9], 1

</llo_original>
